<compile_context>
chip_gen: v5e
topology: v5e:2x2
jax: 0.10.0
libtpu: 0.0.40
codegen_flags: <defaults>
</compile_context>

<pallas_src>
from functools import partial

import jax
import jax.numpy as jnp
from jax.experimental import pallas as pl
from jax.experimental.pallas import tpu as pltpu

_OPS = {
    "add": lambda x, c: x + c,
    "sub": lambda x, c: x - c,
    "mul": lambda x, c: x * c,
    "div": lambda x, c: x / c,
}


def _round_down(n, m):
    return (n // m) * m


def _vmem_budget():
    """Generation-aware (block_target_bytes, vmem_limit_bytes)."""
    try:
        cap = int(pltpu.get_tpu_info().vmem_capacity_bytes)
    except Exception:
        cap = 64 * 1024 * 1024                      # conservative fallback
    if cap >= 128 * 1024 * 1024:                    # v5e / v6e: 128 MiB physical
        return 8 * 1024 * 1024, 64 * 1024 * 1024
    # v7x-class (64 MiB physical VMEM): smaller blocks, limit well under physical.
    return 4 * 1024 * 1024, min(48 * 1024 * 1024, (cap * 3) // 4)


def _pick_tiles(n_rows, n_cols, itemsize, block_target):
    """Pick (tile_rows, tile_cols) so one x/out block is ~block_target bytes."""
    packing = max(8, 32 // itemsize)   # sublane packing: 8 f32 / 16 bf16 / 32 int8
    # Tile the lane axis only when even a minimum-height (packing rows) full-width
    # block would exceed the target; this keeps blocks bounded for any H*W.
    if packing * n_cols * itemsize > block_target:
        tile_cols = max(128, _round_down(block_target // (packing * itemsize), 128))
        tile_cols = min(tile_cols, _round_down(n_cols, 128))
    else:
        tile_cols = n_cols             # full lane extent: exempt from %128 rule
    row_budget = max(packing,
                     _round_down(block_target // (tile_cols * itemsize), packing))
    tile_rows = n_rows if n_rows <= row_budget else row_budget
    return tile_rows, tile_cols


def _bcast_binop_kernel(x_ref, c_ref, o_ref, *, op):
    # x_ref / o_ref: (tile_rows, tile_cols) tile.
    # c_ref: (tile_rows, 1) per-row constant (broadcasts along lanes) or
    #        (1, tile_cols) per-lane constant (broadcasts along sublanes).
    o_ref[...] = op(x_ref[...], c_ref[...]).astype(o_ref.dtype)


def const_quantization_net(x, const, op_name="add"):
    """Forward pass of ConstQuantizationNet(layer=op_name, const=const).

    x:     (B, C, H, W) NCHW activations.
    const: per-channel constant broadcastable to (C, 1, 1) (scalar OK).
    """
    if op_name not in _OPS:
        raise ValueError(f"unsupported op: {op_name}")

    B, C, H, W = x.shape
    hw = H * W
    itemsize = jnp.dtype(x.dtype).itemsize
    block_target, vmem_limit = _vmem_budget()

    # ---- per-channel constant vector (C,) ----------------------------------
    c_chan = jnp.broadcast_to(jnp.asarray(const).reshape(-1, 1, 1), (C, 1, 1))
    c_chan = c_chan.reshape(C)

    op = _OPS[op_name]
    if op_name == "div" and jnp.issubdtype(jnp.dtype(x.dtype), jnp.floating):
        # Reciprocal-multiply: reciprocal computed once, in f32, on the tiny (C,)
        # constant; the big tiles only see a vmul.
        c_chan = 1.0 / c_chan.astype(jnp.float32)
        op = _OPS["mul"]
    # TODO(synk): exact torch.div semantics for integer dtypes (true division
    # promotes to float) are not reproduced; kernel output keeps x.dtype.
    c_chan = c_chan.astype(x.dtype)

    # ---- layout choice ------------------------------------------------------
    if hw % 128 == 0:
        # H*W already lane-dense: slab (B*C, H*W), per-row constant column.
        rows, cols = B * C, hw
        x2 = x.reshape(rows, cols)
        c_arr = jnp.broadcast_to(c_chan.reshape(1, C), (B, C)).reshape(rows, 1)
        tile_rows, tile_cols = _pick_tiles(rows, cols, itemsize, block_target)
        c_spec = pl.BlockSpec((tile_rows, 1), lambda i, j: (i, 0))
    else:
        # Small / odd H*W: fold spatial dims into the lane axis so output stores
        # stay lane-dense (avoids masked sub-128-lane partial stores).
        rows, cols = B, C * hw
        x2 = x.reshape(rows, cols)
        c_arr = jnp.repeat(c_chan, hw).reshape(1, cols)
        tile_rows, tile_cols = _pick_tiles(rows, cols, itemsize, block_target)
        c_spec = pl.BlockSpec((1, tile_cols), lambda i, j: (0, j))

    grid = (pl.cdiv(rows, tile_rows), pl.cdiv(cols, tile_cols))

    out2 = pl.pallas_call(
        partial(_bcast_binop_kernel, op=op),
        out_shape=jax.ShapeDtypeStruct((rows, cols), x.dtype),
        grid_spec=pltpu.PrefetchScalarGridSpec(
            num_scalar_prefetch=0,
            grid=grid,
            in_specs=[
                pl.BlockSpec((tile_rows, tile_cols), lambda i, j: (i, j)),
                c_spec,
            ],
            out_specs=pl.BlockSpec((tile_rows, tile_cols), lambda i, j: (i, j)),
        ),
        compiler_params=pltpu.CompilerParams(
            # TODO(synk): on v7x, CORE_PARALLEL on the row axis (with an even
            # row-tile count) would shard this mem-bound stream across both
            # TensorCores; kept plain "parallel" here for portability.
            dimension_semantics=("parallel", "parallel"),
            vmem_limit_bytes=vmem_limit,
        ),
    )(x2, c_arr)

    return out2.reshape(B, C, H, W)


if __name__ == "__main__":
    key = jax.random.PRNGKey(0)
    kx, kc = jax.random.split(key)

    B, C, H, W = 2, 4, 16, 16
    x = jax.random.normal(kx, (B, C, H, W), dtype=jnp.float32)
    # Per-channel constant, shape (C, 1, 1) like the test's numpy const.
    const = jax.random.normal(kc, (C, 1, 1), dtype=jnp.float32)

    # Primary op (torch.add in the test); H*W % 128 == 0 -> per-row-const layout.
    out = jax.block_until_ready(const_quantization_net(x, const, op_name="add"))
    ref = x + const[None]
    assert out.shape == (B, C, H, W)
    assert jnp.allclose(out, ref, atol=1e-6), "add mismatch vs reference"

    # 'div' path (reciprocal-multiply), const kept away from zero.
    const_div = jnp.abs(const) + 0.5
    out_div = jax.block_until_ready(
        const_quantization_net(x, const_div, op_name="div"))
    assert jnp.allclose(out_div, x / const_div[None],
                        rtol=1e-5, atol=1e-5), "div mismatch"

    # Odd spatial size (7x7) exercises the lane-dense fold layout.
    x7 = jax.random.normal(kx, (B, C, 7, 7), dtype=jnp.float32)
    out7 = jax.block_until_ready(const_quantization_net(x7, const, op_name="mul"))
    assert jnp.allclose(out7, x7 * const[None], atol=1e-6), "fold-layout mismatch"

    print("KERNEL_OK")
</pallas_src>

<mosaic_0001>
module attributes {stable_mosaic.version = 11 : i64} {
  func.func @_bcast_binop_kernel(%arg0: i32, %arg1: i32, %arg2: memref<8x256xf32, #tpu.memory_space<vmem>>, %arg3: memref<8x1xf32, #tpu.memory_space<vmem>>, %arg4: memref<8x256xf32, #tpu.memory_space<vmem>>) attributes {dimension_semantics = [#tpu.dimension_semantics<parallel>, #tpu.dimension_semantics<parallel>], iteration_bounds = array<i64: 1, 1>, scalar_prefetch = 0 : i64, scratch_operands = 0 : i64, tpu.core_type = #tpu.core_type<tc>, window_params = [{transform_indices = @transform_0, window_bounds = array<i64: 8, 256>}, {transform_indices = @transform_1, window_bounds = array<i64: 8, 1>}, {transform_indices = @transform_2, window_bounds = array<i64: 8, 256>}]} {
    %c0 = arith.constant 0 : index
    %c0_0 = arith.constant 0 : index
    %0 = vector.load %arg2[%c0, %c0_0] : memref<8x256xf32, #tpu.memory_space<vmem>>, vector<8x256xf32>
    %c0_1 = arith.constant 0 : index
    %c0_2 = arith.constant 0 : index
    %1 = vector.load %arg3[%c0_1, %c0_2] : memref<8x1xf32, #tpu.memory_space<vmem>>, vector<8x1xf32>
    %2 = vector.broadcast %1 : vector<8x1xf32> to vector<8x256xf32>
    %3 = arith.addf %0, %2 : vector<8x256xf32>
    %c0_3 = arith.constant 0 : index
    %c0_4 = arith.constant 0 : index
    %4 = vector.load %arg4[%c0_3, %c0_4] : memref<8x256xf32, #tpu.memory_space<vmem>>, vector<8x256xf32>
    tpu.vector_store %arg4[%c0_3, %c0_4], %3 {strides = array<i32>} : memref<8x256xf32, #tpu.memory_space<vmem>>, vector<8x256xf32>,
    return
  }
  func.func @transform_0(%arg0: i32, %arg1: i32) -> (i32, i32) {
    %c0_i32 = arith.constant 0 : i32
    return %arg0, %arg1 : i32, i32
  }
  func.func @transform_1(%arg0: i32, %arg1: i32) -> (i32, i32) {
    %c0_i32 = arith.constant 0 : i32
    %c0_i32_0 = arith.constant 0 : i32
    return %arg0, %c0_i32 : i32, i32
  }
  func.func @transform_2(%arg0: i32, %arg1: i32) -> (i32, i32) {
    %c0_i32 = arith.constant 0 : i32
    return %arg0, %arg1 : i32, i32
  }
}

</mosaic_0001>

<llo_original>
// kernel: tpu_custom_call.1
$region0: #{tpu_custom_call.1}
  #allocation0 [shape = 'u32[]', space=smem, size = 0x4, offset = 0x4, fixed_abs, tag = 'smem constant byte address 0x4 - core index']
  #allocation1 [shape = 'u32[72,128]{1,0:T(1,128)}', space=vmem, size = 0x9000, scoped, tag = 'internal scratch']
  %s0 = inlined_call_operand.hbm [shape: f32[8,256], index: 0, kind: input, shape index: {}]
  %s1 = inlined_call_operand.vmem [shape: f32[8,1], index: 1, kind: input, shape index: {}]
  %s2 = inlined_call_operand.hbm [shape: f32[8,256], index: 2, kind: output, shape index: {}]
  %s3 = sld [smem:[#allocation0]]
  $region22: #{tpu_custom_call.1} parent=0
    _
  %s5 = ssub.s32 1, %s3
  %s6 = scalar_select 0, %s5, %s3
  $region1: #{tpu_custom_call.1} parent=0
    #allocation2 [shape = 'u8[8192]{0}', space=vmem, size = 0x2000, scoped, tag = 'input window, operand 0, single buffered']
    #allocation3 [shape = 's32[1]{0}', space=sflag, size = 0x4, scoped, tag = 'scoped memory for tpu_custom_call.1']
    #allocation4 [shape = 's32[1]{0}', space=sflag, size = 0x4, scoped, tag = 'scoped memory for tpu_custom_call.1']
    #allocation5 [shape = 'u8[8192]{0}', space=vmem, size = 0x2000, scoped, tag = 'output window, operand 0, single buffered']
    %7 = vsyncpa [#allocation3], 0
    %8 = vsyncpa [#allocation4], 0
    // Predicated region
    $region2: #{tpu_custom_call.1} parent=1 // pred_check
      _
    $region3: #{tpu_custom_call.1} parent=1 // pred_check_branch
      %10 = sbr.rel (0) target = $region5
    $region4: #{tpu_custom_call.1} parent=1 // pred_region
      %12 = vsyncadd [#allocation3], 0
      %s14 = sshll.u32 %s0, 4
      %s15 = int_to_ptr.hbm [resolvable:$true] %s14
      %s16 = sshll.u32 [#allocation2], 4
      %s17 = int_to_ptr.vmem [resolvable:$true] %s16
      %19 = dma.hbm_to_vmem [thread:$0]  %s15, 256, %s17, [#allocation3]
    $region5: #{tpu_custom_call.1} parent=1 // pred_fallthru
      _
    // Predicated region
    $region6: #{tpu_custom_call.1} parent=1 // pred_check
      _
    $region7: #{tpu_custom_call.1} parent=1 // pred_check_branch
      %21 = sbr.rel (0) target = $region9
    $region8: #{tpu_custom_call.1} parent=1 // pred_region
      _
    $region9: #{tpu_custom_call.1} parent=1 // pred_fallthru
      _
    // Predicated region
    $region10: #{tpu_custom_call.1} parent=1 // pred_check
      _
    $region11: #{tpu_custom_call.1} parent=1 // pred_check_branch
      %23 = sbr.rel (0) target = $region13
    $region12: #{tpu_custom_call.1} parent=1 // pred_region
      %25 = dma.done [#allocation3], 256
    $region13: #{tpu_custom_call.1} parent=1 // pred_fallthru
      _
    %v26 = vld [vmem:[#allocation2] sm:$0xff]
    %v27 = vld [vmem:[#allocation2 + $0x8] sm:$0xff]
    %v28 = vld [vmem:[%s1] sm:$0xff]
    %30 = vset.pattern.permute.xlu0 0
    %31 = vperm.xlu0 %30, %v28
    %v32 = vpop.permute.xlu0 %31
    %v34 = vadd.f32 %v26, %v32
    %v35 = vadd.f32 %v27, %v32
    %36 = vst [vmem:[#allocation5] sm:$0xff] %v34
    %37 = vst [vmem:[#allocation5 + $0x8] sm:$0xff] %v35
    // Predicated region
    $region14: #{tpu_custom_call.1} parent=1 // pred_check
      _
    $region15: #{tpu_custom_call.1} parent=1 // pred_check_branch
      %39 = sbr.rel (0) target = $region17
    $region16: #{tpu_custom_call.1} parent=1 // pred_region
      %41 = vsyncadd [#allocation4], 0
      %s43 = sshll.u32 [#allocation5], 4
      %s44 = int_to_ptr.vmem [resolvable:$true] %s43
      %s45 = sshll.u32 %s2, 4
      %s46 = int_to_ptr.hbm [resolvable:$true] %s45
      %48 = dma.vmem_to_hbm [thread:$0]  %s44, 256, %s46, [#allocation4]
    $region17: #{tpu_custom_call.1} parent=1 // pred_fallthru
      _
    // Predicated region
    $region18: #{tpu_custom_call.1} parent=1 // pred_check
      _
    $region19: #{tpu_custom_call.1} parent=1 // pred_check_branch
      %50 = sbr.rel (0) target = $region21
    $region20: #{tpu_custom_call.1} parent=1 // pred_region
      %52 = dma.done [#allocation4], 256
    $region21: #{tpu_custom_call.1} parent=1 // pred_fallthru
      _
    %53 = vsyncpa [#allocation3], 1
    %54 = vsyncpa [#allocation4], 1

</llo_original>
